<compile_context>
chip_gen: v7x
topology: tpu7x:2x2x1
jax: 0.10.0
libtpu: 0.0.40
codegen_flags: <defaults>
</compile_context>

<pallas_src>
import jax
import jax.numpy as jnp
from jax.experimental import pallas as pl
from jax.experimental.pallas import tpu as pltpu


def fsm_kernel(x_ref, w_ref, b_ref, att_ref, reg_ref):
    # x_ref:   (1, C, HW)  one batch element, native NCHW (spatially flattened)
    # w_ref:   (F, C)      fused 1x1-conv weights, rows = [region_conv (D) | attention (R)]
    # b_ref:   (F, 1)      fused biases (broadcast over HW lanes)
    # att_ref: (1, R, HW)  softmaxed attention maps
    # reg_ref: (1, R, D)   attention-pooled region features
    R = att_ref.shape[1]
    D = reg_ref.shape[2]

    x = x_ref[0]                                                    # (C, HW)

    # One fused MXU push per batch element: (F, C) @ (C, HW) -> (F, HW).
    fused = jnp.dot(w_ref[...], x, preferred_element_type=jnp.float32) + b_ref[...]

    # Sublane-aligned split (D is a multiple of 8): pure masking, no lane shifts.
    rfeat = fused[:D, :]                                            # (D, HW)
    logits = fused[D:, :]                                           # (R, HW)

    # Softmax over the region axis (sublane rows). R is tiny & static -> unrolled
    # pairwise VPU max/add instead of an XLU reduce.
    m = logits[0:1, :]
    for r in range(1, R):
        m = jnp.maximum(m, logits[r:r + 1, :])
    e = jnp.exp(logits - m)                                         # (R, HW)
    s = e[0:1, :]
    for r in range(1, R):
        s = s + e[r:r + 1, :]
    att = e / s                                                     # exact divide

    # Attention-weighted spatial pooling: contract HW directly (no transpose):
    # (R, HW) x (D, HW) -> (R, D).
    reg = jax.lax.dot_general(att, rfeat, (((1,), (1,)), ((), ())),
                              preferred_element_type=jnp.float32)

    att_ref[0] = att.astype(att_ref.dtype)
    reg_ref[0] = reg.astype(reg_ref.dtype)


def feature_segmentation(features_nchw, wa, ba, wr, br):
    """features_nchw: (B, C, H, W).
    wa: (C, R), ba: (R,), wr: (C, D), br: (D,)  -- 1x1 conv weights (squeezed).
    Returns (region_features (B, R, D), attention_maps (B, R, H, W))."""
    B, C, H, W = features_nchw.shape
    R = wa.shape[1]
    D = wr.shape[1]
    HW = H * W
    F = D + R

    # Free contiguous reshape of the NCHW tensor -- no HBM transpose.
    x = features_nchw.reshape(B, C, HW)

    # Fused, pre-transposed (F, C) weight; region_conv rows FIRST (sublane-aligned split).
    w_fc = jnp.concatenate([wr.T, wa.T], axis=0).astype(x.dtype)     # (F, C)
    b_fc = jnp.concatenate([br, ba]).reshape(F, 1).astype(jnp.float32)

    att, reg = pl.pallas_call(
        fsm_kernel,
        out_shape=(
            jax.ShapeDtypeStruct((B, R, HW), jnp.float32),
            jax.ShapeDtypeStruct((B, R, D), jnp.float32),
        ),
        grid_spec=pltpu.PrefetchScalarGridSpec(
            num_scalar_prefetch=0,
            grid=(B,),
            in_specs=[
                pl.BlockSpec((1, C, HW), lambda b: (b, 0, 0)),
                pl.BlockSpec((F, C), lambda b: (0, 0)),
                pl.BlockSpec((F, 1), lambda b: (0, 0)),
            ],
            out_specs=[
                pl.BlockSpec((1, R, HW), lambda b: (b, 0, 0)),
                pl.BlockSpec((1, R, D), lambda b: (b, 0, 0)),
            ],
        ),
        compiler_params=pltpu.CompilerParams(
            dimension_semantics=("parallel",)),   # v7x: shard batch over 2 TCs
    )(x, w_fc, b_fc)

    # (B, R, HW) -> (B, R, H, W): pure contiguous reshape.
    attention_maps = att.reshape(B, R, H, W)
    return reg, attention_maps


def _reference(features_nchw, wa, ba, wr, br):
    B, C, H, W = features_nchw.shape
    x = jnp.transpose(features_nchw, (0, 2, 3, 1)).reshape(B, H * W, C)
    logits = x @ wa + ba[None, None, :]
    att = jax.nn.softmax(logits, axis=-1)                       # (B, HW, R)
    rfeat = x @ wr + br[None, None, :]                          # (B, HW, D)
    reg = jnp.einsum("bsr,bsd->brd", att, rfeat)                # (B, R, D)
    att_maps = jnp.transpose(att, (0, 2, 1)).reshape(B, -1, H, W)
    return reg, att_maps


if __name__ == "__main__":
    # Small shapes consistent with the module (input_dim=C, num_regions=R, region_dim=D).
    B, C, H, W = 2, 32, 8, 8
    R, D = 6, 16

    key = jax.random.PRNGKey(0)
    k_x, k_wa, k_ba, k_wr, k_br = jax.random.split(key, 5)

    features = jax.random.normal(k_x, (B, C, H, W), dtype=jnp.float32)

    # Deterministic "conv" params (1x1 kernels squeezed to matrices).
    # PyTorch conv weight shape is (out, in, 1, 1); stored here as (in, out).
    bound = 1.0 / (C ** 0.5)
    wa = jax.random.uniform(k_wa, (C, R), minval=-bound, maxval=bound, dtype=jnp.float32)
    ba = jax.random.uniform(k_ba, (R,), minval=-bound, maxval=bound, dtype=jnp.float32)
    wr = jax.random.uniform(k_wr, (C, D), minval=-bound, maxval=bound, dtype=jnp.float32)
    br = jax.random.uniform(k_br, (D,), minval=-bound, maxval=bound, dtype=jnp.float32)

    region_features, attention_maps = feature_segmentation(features, wa, ba, wr, br)
    jax.block_until_ready((region_features, attention_maps))

    ref_reg, ref_att = _reference(features, wa, ba, wr, br)
    assert region_features.shape == (B, R, D)
    assert attention_maps.shape == (B, R, H, W)
    # Exact softmax divide + f32 accumulation everywhere -> tight tolerances.
    assert jnp.allclose(region_features, ref_reg, atol=1e-4, rtol=1e-4)
    assert jnp.allclose(attention_maps, ref_att, atol=1e-5, rtol=1e-5)

    print("KERNEL_OK")
</pallas_src>

<mosaic_0001>
module attributes {stable_mosaic.version = 11 : i64} {
  func.func @fsm_kernel(%arg0: i32, %arg1: memref<1x32x64xf32, #tpu.memory_space<vmem>>, %arg2: memref<22x32xf32, #tpu.memory_space<vmem>>, %arg3: memref<22x1xf32, #tpu.memory_space<vmem>>, %arg4: memref<1x6x64xf32, #tpu.memory_space<vmem>>, %arg5: memref<1x6x16xf32, #tpu.memory_space<vmem>>) attributes {dimension_semantics = [#tpu.dimension_semantics<parallel>], iteration_bounds = array<i64: 2>, scalar_prefetch = 0 : i64, scratch_operands = 0 : i64, tpu.core_type = #tpu.core_type<tc>, window_params = [{transform_indices = @transform_0, window_bounds = array<i64: 1, 32, 64>}, {pipeline_mode = #tpu.pipeline_mode<synchronous>, transform_indices = @transform_1, window_bounds = array<i64: 22, 32>}, {pipeline_mode = #tpu.pipeline_mode<synchronous>, transform_indices = @transform_2, window_bounds = array<i64: 22, 1>}, {transform_indices = @transform_3, window_bounds = array<i64: 1, 6, 64>}, {transform_indices = @transform_4, window_bounds = array<i64: 1, 6, 16>}]} {
    %c0 = arith.constant 0 : index
    %c0_0 = arith.constant 0 : index
    %c0_1 = arith.constant 0 : index
    %0 = vector.load %arg1[%c0, %c0_0, %c0_1] : memref<1x32x64xf32, #tpu.memory_space<vmem>>, vector<1x32x64xf32>
    %1 = vector.shape_cast %0 : vector<1x32x64xf32> to vector<32x64xf32>
    %c0_2 = arith.constant 0 : index
    %c0_3 = arith.constant 0 : index
    %2 = vector.load %arg2[%c0_2, %c0_3] : memref<22x32xf32, #tpu.memory_space<vmem>>, vector<22x32xf32>
    %cst = arith.constant dense<0.000000e+00> : vector<22x64xf32>
    %3 = tpu.matmul %2, %1, %cst {dimension_numbers = #tpu.dot_dimension_numbers<[1], [0], [0], [1], [0, 0, 1, 1], [], []>} : vector<22x32xf32>, vector<32x64xf32>, vector<22x64xf32> -> vector<22x64xf32>
    %c0_4 = arith.constant 0 : index
    %c0_5 = arith.constant 0 : index
    %4 = vector.load %arg3[%c0_4, %c0_5] : memref<22x1xf32, #tpu.memory_space<vmem>>, vector<22x1xf32>
    %5 = vector.broadcast %4 : vector<22x1xf32> to vector<22x64xf32>
    %6 = arith.addf %3, %5 : vector<22x64xf32>
    %7 = vector.extract_strided_slice %6 {offsets = [0, 0], sizes = [16, 64], strides = [1, 1]} : vector<22x64xf32> to vector<16x64xf32>
    %8 = vector.extract_strided_slice %6 {offsets = [16, 0], sizes = [6, 64], strides = [1, 1]} : vector<22x64xf32> to vector<6x64xf32>
    %9 = vector.extract_strided_slice %8 {offsets = [0, 0], sizes = [1, 64], strides = [1, 1]} : vector<6x64xf32> to vector<1x64xf32>
    %10 = vector.extract_strided_slice %8 {offsets = [1, 0], sizes = [1, 64], strides = [1, 1]} : vector<6x64xf32> to vector<1x64xf32>
    %11 = arith.maximumf %9, %10 : vector<1x64xf32>
    %12 = vector.extract_strided_slice %8 {offsets = [2, 0], sizes = [1, 64], strides = [1, 1]} : vector<6x64xf32> to vector<1x64xf32>
    %13 = arith.maximumf %11, %12 : vector<1x64xf32>
    %14 = vector.extract_strided_slice %8 {offsets = [3, 0], sizes = [1, 64], strides = [1, 1]} : vector<6x64xf32> to vector<1x64xf32>
    %15 = arith.maximumf %13, %14 : vector<1x64xf32>
    %16 = vector.extract_strided_slice %8 {offsets = [4, 0], sizes = [1, 64], strides = [1, 1]} : vector<6x64xf32> to vector<1x64xf32>
    %17 = arith.maximumf %15, %16 : vector<1x64xf32>
    %18 = vector.extract_strided_slice %8 {offsets = [5, 0], sizes = [1, 64], strides = [1, 1]} : vector<6x64xf32> to vector<1x64xf32>
    %19 = arith.maximumf %17, %18 : vector<1x64xf32>
    %20 = vector.broadcast %19 : vector<1x64xf32> to vector<6x64xf32>
    %21 = arith.subf %8, %20 : vector<6x64xf32>
    %22 = math.exp %21 : vector<6x64xf32>
    %23 = vector.extract_strided_slice %22 {offsets = [0, 0], sizes = [1, 64], strides = [1, 1]} : vector<6x64xf32> to vector<1x64xf32>
    %24 = vector.extract_strided_slice %22 {offsets = [1, 0], sizes = [1, 64], strides = [1, 1]} : vector<6x64xf32> to vector<1x64xf32>
    %25 = arith.addf %23, %24 : vector<1x64xf32>
    %26 = vector.extract_strided_slice %22 {offsets = [2, 0], sizes = [1, 64], strides = [1, 1]} : vector<6x64xf32> to vector<1x64xf32>
    %27 = arith.addf %25, %26 : vector<1x64xf32>
    %28 = vector.extract_strided_slice %22 {offsets = [3, 0], sizes = [1, 64], strides = [1, 1]} : vector<6x64xf32> to vector<1x64xf32>
    %29 = arith.addf %27, %28 : vector<1x64xf32>
    %30 = vector.extract_strided_slice %22 {offsets = [4, 0], sizes = [1, 64], strides = [1, 1]} : vector<6x64xf32> to vector<1x64xf32>
    %31 = arith.addf %29, %30 : vector<1x64xf32>
    %32 = vector.extract_strided_slice %22 {offsets = [5, 0], sizes = [1, 64], strides = [1, 1]} : vector<6x64xf32> to vector<1x64xf32>
    %33 = arith.addf %31, %32 : vector<1x64xf32>
    %34 = vector.broadcast %33 : vector<1x64xf32> to vector<6x64xf32>
    %35 = arith.divf %22, %34 : vector<6x64xf32>
    %cst_6 = arith.constant dense<0.000000e+00> : vector<6x16xf32>
    %36 = tpu.matmul %35, %7, %cst_6 {dimension_numbers = #tpu.dot_dimension_numbers<[1], [1], [0], [0], [0, 0, 1, 0], [], []>} : vector<6x64xf32>, vector<16x64xf32>, vector<6x16xf32> -> vector<6x16xf32>
    %c0_7 = arith.constant 0 : index
    %c0_8 = arith.constant 0 : index
    %c0_9 = arith.constant 0 : index
    %37 = vector.load %arg4[%c0_7, %c0_8, %c0_9] : memref<1x6x64xf32, #tpu.memory_space<vmem>>, vector<1x6x64xf32>
    %38 = vector.shape_cast %37 : vector<1x6x64xf32> to vector<6x64xf32>
    %39 = vector.shape_cast %35 : vector<6x64xf32> to vector<1x6x64xf32>
    tpu.vector_store %arg4[%c0_7, %c0_8, %c0_9], %39 {strides = array<i32>} : memref<1x6x64xf32, #tpu.memory_space<vmem>>, vector<1x6x64xf32>,
    %c0_10 = arith.constant 0 : index
    %c0_11 = arith.constant 0 : index
    %c0_12 = arith.constant 0 : index
    %40 = vector.load %arg5[%c0_10, %c0_11, %c0_12] : memref<1x6x16xf32, #tpu.memory_space<vmem>>, vector<1x6x16xf32>
    %41 = vector.shape_cast %40 : vector<1x6x16xf32> to vector<6x16xf32>
    %42 = vector.shape_cast %36 : vector<6x16xf32> to vector<1x6x16xf32>
    tpu.vector_store %arg5[%c0_10, %c0_11, %c0_12], %42 {strides = array<i32>} : memref<1x6x16xf32, #tpu.memory_space<vmem>>, vector<1x6x16xf32>,
    return
  }
  func.func @transform_0(%arg0: i32) -> (i32, i32, i32) {
    %c0_i32 = arith.constant 0 : i32
    %c0_i32_0 = arith.constant 0 : i32
    %c0_i32_1 = arith.constant 0 : i32
    return %arg0, %c0_i32, %c0_i32_0 : i32, i32, i32
  }
  func.func @transform_1(%arg0: i32) -> (i32, i32) {
    %c0_i32 = arith.constant 0 : i32
    %c0_i32_0 = arith.constant 0 : i32
    %c0_i32_1 = arith.constant 0 : i32
    return %c0_i32, %c0_i32_0 : i32, i32
  }
  func.func @transform_2(%arg0: i32) -> (i32, i32) {
    %c0_i32 = arith.constant 0 : i32
    %c0_i32_0 = arith.constant 0 : i32
    %c0_i32_1 = arith.constant 0 : i32
    return %c0_i32, %c0_i32_0 : i32, i32
  }
  func.func @transform_3(%arg0: i32) -> (i32, i32, i32) {
    %c0_i32 = arith.constant 0 : i32
    %c0_i32_0 = arith.constant 0 : i32
    %c0_i32_1 = arith.constant 0 : i32
    return %arg0, %c0_i32, %c0_i32_0 : i32, i32, i32
  }
  func.func @transform_4(%arg0: i32) -> (i32, i32, i32) {
    %c0_i32 = arith.constant 0 : i32
    %c0_i32_0 = arith.constant 0 : i32
    %c0_i32_1 = arith.constant 0 : i32
    return %arg0, %c0_i32, %c0_i32_0 : i32, i32, i32
  }
}

</mosaic_0001>

<llo_original>
// kernel: tpu_custom_call.1
$region0: #{tpu_custom_call.1}
  #allocation0 [shape = 'u32[]', space=smem, size = 0x4, offset = 0x4, fixed_abs, tag = 'smem constant byte address 0x4 - core index']
  #allocation1 [shape = 'u32[144,128]{1,0:T(1,128)}', space=vmem, size = 0x12000, scoped, tag = 'internal scratch']
  %s0 = inlined_call_operand.hbm [shape: f32[2,32,64], index: 0, kind: input, shape index: {}]
  %s1 = inlined_call_operand.vmem [shape: f32[22,32], index: 1, kind: input, shape index: {}]
  %s2 = inlined_call_operand.vmem [shape: f32[22,1], index: 2, kind: input, shape index: {}]
  %s3 = inlined_call_operand.vmem [shape: f32[2,6,64], index: 3, kind: output, shape index: {0}]
  %s4 = inlined_call_operand.vmem [shape: f32[2,6,16], index: 4, kind: output, shape index: {1}]
  %5 = xla_tuple %s3, %s4
  %s6 = sld [smem:[#allocation0]]
  $region57: #{tpu_custom_call.1} parent=0
    _
  %s8 = ssub.s32 1, %s6
  %s9 = scalar_select 0, %s8, %s6
  $region1: #{tpu_custom_call.1} parent=0
    #allocation2 [shape = 'u8[32768]{0}', space=vmem, size = 0x8000, scoped, tag = 'input window, operand 0']
    #allocation3 [shape = 's32[2]{0}', space=sflag, size = 0x8, scoped, tag = 'scoped memory for tpu_custom_call.1']
    %10 = vsyncpa [#allocation3], 0
    %s11 = scalar_lea.sflag [#allocation3], 1
    %12 = vsyncpa %s11, 0
    loop: start=0, step=1, limit=4
    $region2: #{tpu_custom_call.1} parent=1 // loop_pre_header
      _
    $region3: #{tpu_custom_call.1} parent=1 // loop_header
      %s14 = sphi 0, %s18
      %p15 = scmp.ge.s32.totalorder %s14, 4
      %s24 = sphi 0, %s26
      %s27 = sphi 0, %s24
      %s28 = sphi 0, %s27
      %s44 = sphi 0, %s28
      %s48 = sphi 0, %s48
      %s50 = sphi 0, %s48
      %s51 = sphi 0, %s50
      %s65 = sphi 0, %s51
      %s69 = sphi 0, %s69
      %s71 = sphi 0, %s69
      %s72 = sphi 0, %s71
      %s86 = sphi 0, %s72
      %s92 = sphi 0, %s94
      %s95 = sphi 0, %s92
      %s96 = sphi 0, %s95
      %s112 = sphi 0, %s96
      %s118 = sphi 0, %s120
      %s121 = sphi 0, %s118
      %s122 = sphi 0, %s121
      %s138 = sphi 0, %s122
    $region4: #{tpu_custom_call.1} parent=1 // loop_header_branch
      %17 = sbr.rel (%p15) target = $region8
    $region5: #{tpu_custom_call.1} parent=1 // loop_body
      %s19 = ssub.s32 %s14, 1
      %s20 = ssub.s32 %s14, 2
      %s21 = sadd.s32 %s14, 1
      %s22 = ssub.s32 %s14, %s21
      %p23 = scmp.eq.s32.totalorder %s22, 0
      %s25 = sadd.s32 %s24, 1
      %s26 = scalar_select %p23, %s24, %s25
      %p29 = pneg %p23
      %p30 = scmp.eq.s32.totalorder %s14, 1
      %p31 = por %p29, %p30
      %p32 = scmp.ne.s32.totalorder %s24, %s27
      %p33 = scmp.eq.s32.totalorder %s14, 0
      %p34 = por %p32, %p33
      %p35 = scmp.ne.s32.totalorder %s24, %s27
      %p36 = scmp.eq.s32.totalorder %s19, 1
      %p37 = por %p35, %p36
      %p38 = scmp.ne.s32.totalorder %s27, %s28
      %p39 = scmp.eq.s32.totalorder %s19, 0
      %p40 = por %p38, %p39
      %p41 = scmp.ne.s32.totalorder %s27, %s28
      %p42 = scmp.eq.s32.totalorder %s20, 1
      %p43 = por %p41, %p42
      %p45 = scmp.ne.s32.totalorder %s28, %s44
      %p46 = scmp.eq.s32.totalorder %s20, 0
      %p47 = por %p45, %p46
      %s49 = sadd.s32 %s48, 1
      %p52 = scmp.eq.s32.totalorder %s14, 1
      %p53 = scmp.ne.s32.totalorder %s48, %s50
      %p54 = scmp.eq.s32.totalorder %s14, 0
      %p55 = por %p53, %p54
      %p56 = scmp.ne.s32.totalorder %s48, %s50
      %p57 = scmp.eq.s32.totalorder %s19, 1
      %p58 = por %p56, %p57
      %p59 = scmp.ne.s32.totalorder %s50, %s51
      %p60 = scmp.eq.s32.totalorder %s19, 0
      %p61 = por %p59, %p60
      %p62 = scmp.ne.s32.totalorder %s50, %s51
      %p63 = scmp.eq.s32.totalorder %s20, 1
      %p64 = por %p62, %p63
      %p66 = scmp.ne.s32.totalorder %s51, %s65
      %p67 = scmp.eq.s32.totalorder %s20, 0
      %p68 = por %p66, %p67
      %s70 = sadd.s32 %s69, 1
      %p73 = scmp.eq.s32.totalorder %s14, 1
      %p74 = scmp.ne.s32.totalorder %s69, %s71
      %p75 = scmp.eq.s32.totalorder %s14, 0
      %p76 = por %p74, %p75
      %p77 = scmp.ne.s32.totalorder %s69, %s71
      %p78 = scmp.eq.s32.totalorder %s19, 1
      %p79 = por %p77, %p78
      %p80 = scmp.ne.s32.totalorder %s71, %s72
      %p81 = scmp.eq.s32.totalorder %s19, 0
      %p82 = por %p80, %p81
      %p83 = scmp.ne.s32.totalorder %s71, %s72
      %p84 = scmp.eq.s32.totalorder %s20, 1
      %p85 = por %p83, %p84
      %p87 = scmp.ne.s32.totalorder %s72, %s86
      %p88 = scmp.eq.s32.totalorder %s20, 0
      %p89 = por %p87, %p88
      %s90 = ssub.s32 %s14, %s21
      %p91 = scmp.eq.s32.totalorder %s90, 0
      %s93 = sadd.s32 %s92, 1
      %s94 = scalar_select %p91, %s92, %s93
      %p97 = pneg %p91
      %p98 = scmp.eq.s32.totalorder %s14, 1
      %p99 = por %p97, %p98
      %p100 = scmp.ne.s32.totalorder %s92, %s95
      %p101 = scmp.eq.s32.totalorder %s14, 0
      %p102 = por %p100, %p101
      %p103 = scmp.ne.s32.totalorder %s92, %s95
      %p104 = scmp.eq.s32.totalorder %s19, 1
      %p105 = por %p103, %p104
      %p106 = scmp.ne.s32.totalorder %s95, %s96
      %p107 = scmp.eq.s32.totalorder %s19, 0
      %p108 = por %p106, %p107
      %p109 = scmp.ne.s32.totalorder %s95, %s96
      %p110 = scmp.eq.s32.totalorder %s20, 1
      %p111 = por %p109, %p110
      %p113 = scmp.ne.s32.totalorder %s96, %s112
      %p114 = scmp.eq.s32.totalorder %s20, 0
      %p115 = por %p113, %p114
      %s116 = ssub.s32 %s14, %s21
      %p117 = scmp.eq.s32.totalorder %s116, 0
      %s119 = sadd.s32 %s118, 1
      %s120 = scalar_select %p117, %s118, %s119
      %p123 = pneg %p117
      %p124 = scmp.eq.s32.totalorder %s14, 1
      %p125 = por %p123, %p124
      %p126 = scmp.ne.s32.totalorder %s118, %s121
      %p127 = scmp.eq.s32.totalorder %s14, 0
      %p128 = por %p126, %p127
      %p129 = scmp.ne.s32.totalorder %s118, %s121
      %p130 = scmp.eq.s32.totalorder %s19, 1
      %p131 = por %p129, %p130
      %p132 = scmp.ne.s32.totalorder %s121, %s122
      %p133 = scmp.eq.s32.totalorder %s19, 0
      %p134 = por %p132, %p133
      %p135 = scmp.ne.s32.totalorder %s121, %s122
      %p136 = scmp.eq.s32.totalorder %s20, 1
      %p137 = por %p135, %p136
      %p139 = scmp.ne.s32.totalorder %s122, %s138
      %p140 = scmp.eq.s32.totalorder %s20, 0
      %p141 = por %p139, %p140
      %p142 = scmp.le.s32.totalorder 1, %s14
      %p143 = scmp.lt.s32.totalorder %s14, 3
      %p144 = pnand %p142, %p143
      %p145 = pneg %p144
      // Predicated region
      $region9: #{tpu_custom_call.1} parent=5 // pred_check
        _
      $region10: #{tpu_custom_call.1} parent=5 // pred_check_branch
        %147 = sbr.rel (%p144) target = $region12
      $region11: #{tpu_custom_call.1} parent=5 // pred_region
        %s148 = ssub.s32 %s14, 1
        // Predicated region
        $region13: #{tpu_custom_call.1} parent=11 // pred_check
          %p149 = pneg %p61
        $region14: #{tpu_custom_call.1} parent=11 // pred_check_branch
          %151 = sbr.rel (%p149) target = $region16
        $region15: #{tpu_custom_call.1} parent=11 // pred_region
          _
        $region16: #{tpu_custom_call.1} parent=11 // pred_fallthru
          _
        // Predicated region
        $region17: #{tpu_custom_call.1} parent=11 // pred_check
          %p152 = pneg %p82
        $region18: #{tpu_custom_call.1} parent=11 // pred_check_branch
          %154 = sbr.rel (%p152) target = $region20
        $region19: #{tpu_custom_call.1} parent=11 // pred_region
          _
        $region20: #{tpu_custom_call.1} parent=11 // pred_fallthru
          _
      $region12: #{tpu_custom_call.1} parent=5 // pred_fallthru
        _
      %p155 = scmp.lt.s32.totalorder %s14, 2
      // Predicated region
      $region21: #{tpu_custom_call.1} parent=5 // pred_check
        %p156 = pneg %p155
      $region22: #{tpu_custom_call.1} parent=5 // pred_check_branch
        %158 = sbr.rel (%p156) target = $region24
      $region23: #{tpu_custom_call.1} parent=5 // pred_region
        // Predicated region
        $region25: #{tpu_custom_call.1} parent=23 // pred_check
          %p159 = pneg %p34
        $region26: #{tpu_custom_call.1} parent=23 // pred_check_branch
          %161 = sbr.rel (%p159) target = $region28
        $region27: #{tpu_custom_call.1} parent=23 // pred_region
          %s162 = sand.u32 %s24, 1
          %s163 = scalar_lea.sflag [#allocation3], %s162
          %s164 = sand.u32 %s24, 1
          %s165 = smul.addr %s164, 32
          %s166 = scalar_lea.vmem [#allocation2], %s165
          %s168 = ssub.s32 512, 512
          %169 = vsyncadd %s163, %s168
          %s170 = smul.addr %s14, 4
          %s171 = smul.addr %s170, 128
          %s172 = scalar_lea.hbm %s0, %s171
          %s173 = sshll.u32 %s166, 4
          %s174 = int_to_ptr.vmem [resolvable:$true] %s173
          %179 = dma.hbm_to_vmem [thread:$0]  %s172, 512, %s174, %s163, 128, 128, 8
        $region28: #{tpu_custom_call.1} parent=23 // pred_fallthru
          _
      $region24: #{tpu_custom_call.1} parent=5 // pred_fallthru
        _
      %p180 = scmp.le.s32.totalorder 1, %s14
      %p181 = scmp.lt.s32.totalorder %s14, 3
      %p182 = pnand %p180, %p181
      %p183 = pneg %p182
      // Predicated region
      $region29: #{tpu_custom_call.1} parent=5 // pred_check
        _
      $region30: #{tpu_custom_call.1} parent=5 // pred_check_branch
        %185 = sbr.rel (%p182) target = $region32
      $region31: #{tpu_custom_call.1} parent=5 // pred_region
        %s186 = ssub.s32 %s14, 1
        %s187 = sand.u32 %s27, 1
        %s188 = scalar_lea.sflag [#allocation3], %s187
        %s189 = sand.u32 %s27, 1
        %s190 = smul.addr %s189, 32
        %s191 = scalar_lea.vmem [#allocation2], %s190
        // Predicated region
        $region33: #{tpu_custom_call.1} parent=31 // pred_check
          %p192 = pneg %p40
        $region34: #{tpu_custom_call.1} parent=31 // pred_check_branch
          %194 = sbr.rel (%p192) target = $region36
        $region35: #{tpu_custom_call.1} parent=31 // pred_region
          %195 = dma.done %s188, 512
        $region36: #{tpu_custom_call.1} parent=31 // pred_fallthru
          _
        %s196 = sand.u32 %s27, 1
        %s197 = scalar_lea.sflag [#allocation3], %s196
        %s198 = sand.u32 %s27, 1
        %s199 = smul.addr %s198, 32
        %s200 = scalar_lea.vmem [#allocation2], %s199
        %p201 = pneg %p40
        %p202 = pneg %p37
        %p203 = pneg %p61
        %p204 = pneg %p58
        %p205 = pneg %p82
        %p206 = pneg %p79
        %p207 = pneg %p108
        %p208 = pneg %p105
        %p209 = scmp.lt.s32.totalorder %s19, 1
        %s210 = scalar_select %p209, %s19, 1
        %s211 = smul.addr %s210, 8
        %s212 = scalar_lea.vmem %s3, %s211
        %p213 = pneg %p134
        %p214 = pneg %p131
        %p215 = scmp.lt.s32.totalorder %s19, 1
        %s216 = scalar_select %p215, %s19, 1
        %s217 = smul.addr %s216, 8
        %s218 = scalar_lea.vmem %s4, %s217
        %p219 = scmp.lt.s32.totalorder %s19, 1
        %s220 = scalar_select %p219, %s19, 1
        %s221 = smul.addr %s220, 8
        %s222 = scalar_lea.vmem %s3, %s221
        %p223 = scmp.lt.s32.totalorder %s19, 1
        %s224 = scalar_select %p223, %s19, 1
        %s225 = smul.addr %s224, 8
        %s226 = scalar_lea.vmem %s4, %s225
        %v227 = vld [vmem:[%s191] sm:$0xff]
        %v228 = vld [vmem:[%s191 + $0x8] sm:$0xff]
        %v229 = vld [vmem:[%s191 + $0x10] sm:$0xff]
        %v230 = vld [vmem:[%s191 + $0x18] sm:$0xff]
        %v231 = vld [vmem:[%s1] sm:$0xff]
        %v232 = vld [vmem:[%s1 + $0x8] sm:$0xff]
        %v233 = vld [vmem:[%s1 + $0x10] sm:$0x3f]
        %v234 = vld [vmem:[%s2] sm:$0xff]
        %v235 = vld [vmem:[%s2 + $0x8] sm:$0xff]
        %v236 = vld [vmem:[%s2 + $0x10] sm:$0x3f]
        %238 = vset.pattern.permute.xlu0 0
        %239 = vperm.xlu0 %238, %v234
        %v240 = vpop.permute.xlu0 %239
        %243 = vset.pattern.permute.xlu0 0
        %244 = vperm.xlu0 %243, %v235
        %v245 = vpop.permute.xlu0 %244
        %248 = vset.pattern.permute.xlu0 0
        %249 = vperm.xlu0 %248, %v236
        %v250 = vpop.permute.xlu0 %249
        %vm252 = vcmask 261120
        %v254 = vsel %vm252, %v231, 0
        %v257 = vsel %vm252, %v232, 0
        %v260 = vsel %vm252, %v233, 0
        %262 = vmatprep.subr.mxu0 0.0
        %263 = vmatpush1.msra.mxu0 %v227
        %264 = vmatprep.subr.mxu0 0.0
        %265 = vmatpush1.msra.mxu0 %v228
        %266 = vmatprep.subr.mxu0 0.0
        %267 = vmatpush1.msra.mxu0 %v229
        %268 = vmatprep.subr.mxu0 0.0
        %269 = vmatpush1.msra.mxu0 %v230
        %270 = vmatprep.subr.mxu0 0.0
        %271 = vmatpush1.msra.mxu0 0.0
        %272 = vmatprep.subr.mxu0 0.0
        %273 = vmatpush1.msra.mxu0 0.0
        %274 = vmatprep.subr.mxu0 0.0
        %275 = vmatpush1.msra.mxu0 0.0
        %276 = vmatprep.subr.mxu0 0.0
        %277 = vmatpush1.msra.mxu0 0.0
        %278 = vmatprep.subr.mxu0 0.0
        %279 = vmatpush1.msra.mxu0 0.0
        %280 = vmatprep.subr.mxu0 0.0
        %281 = vmatpush1.msra.mxu0 0.0
        %282 = vmatprep.subr.mxu0 0.0
        %283 = vmatpush1.msra.mxu0 0.0
        %284 = vmatprep.subr.mxu0 0.0
        %285 = vmatpush1.msra.mxu0 0.0
        %286 = vmatprep.subr.mxu0 0.0
        %287 = vmatpush1.msra.mxu0 0.0
        %288 = vmatprep.subr.mxu0 0.0
        %289 = vmatpush1.msra.mxu0 0.0
        %290 = vmatprep.subr.mxu0 0.0
        %291 = vmatpush1.msra.mxu0 0.0
        %292 = vmatprep.subr.mxu0 0.0
        %293 = vmatpush1.msra.mxu0 0.0
        %294 = vmatprep.subr.mxu0 0.0
        %295 = vmatpush1.msra.mxu0 0.0
        %296 = vmatprep.subr.mxu0 0.0
        %297 = vmatpush1.msra.mxu0 0.0
        %298 = vmatprep.subr.mxu0 0.0
        %299 = vmatpush1.msra.mxu0 0.0
        %300 = vmatprep.subr.mxu0 0.0
        %301 = vmatpush1.msra.mxu0 0.0
        %302 = vmatprep.subr.mxu0 0.0
        %303 = vmatpush1.msra.mxu0 0.0
        %304 = vmatprep.subr.mxu0 0.0
        %305 = vmatpush1.msra.mxu0 0.0
        %306 = vmatprep.subr.mxu0 0.0
        %307 = vmatpush1.msra.mxu0 0.0
        %308 = vmatprep.subr.mxu0 0.0
        %309 = vmatpush1.msra.mxu0 0.0
        %310 = vmatprep.subr.mxu0 0.0
        %311 = vmatpush1.msra.mxu0 0.0
        %312 = vmatprep.subr.mxu0 0.0
        %313 = vmatpush1.msra.mxu0 0.0
        %314 = vmatprep.subr.mxu0 0.0
        %315 = vmatpush1.msra.mxu0 0.0
        %316 = vmatprep.subr.mxu0 0.0
        %317 = vmatpush1.msra.mxu0 0.0
        %318 = vmatprep.subr.mxu0 0.0
        %319 = vmatpush1.msra.mxu0 0.0
        %320 = vmatprep.subr.mxu0 0.0
        %321 = vmatpush1.msra.mxu0 0.0
        %322 = vmatprep.subr.mxu0 0.0
        %323 = vmatpush1.msra.mxu0 0.0
        %324 = vmatprep.subr.mxu0 0.0
        %325 = vmatpush1.msra.mxu0 0.0
        %326 = vmatprep.mubr.f32.mxu0 0.0
        %327 = vmatmul.mubr.f32.gmra.mrb[0].mxu0 %v254
        %v328 = vpop.f32.mrb[0].mxu0
        %v329 = vadd.f32 %v240, %v328
        %v330 = vpop.f32.mrb[0].mxu0
        %331 = vmatprep.mubr.f32.mxu0 0.0
        %332 = vmatmul.mubr.f32.gmra.mrb[0].mxu0 %v257
        %v333 = vpop.f32.mrb[0].mxu0
        %v334 = vadd.f32 %v245, %v333
        %v335 = vpop.f32.mrb[0].mxu0
        %336 = vmatprep.mubr.f32.mxu0 0.0
        %337 = vmatmul.mubr.f32.gmra.mrb[0].mxu0 %v260
        %v338 = vpop.f32.mrb[0].mxu0
        %v339 = vadd.f32 %v250, %v338
        %v340 = vpop.f32.mrb[0].mxu0
        %341 = vdwg.mxu0
        %v343 = vrot.slane %v339, 1
        %v345 = vmax.f32 %v339, %v343
        %v346 = vrot.slane %v339, 2
        %v348 = vmax.f32 %v345, %v346
        %v349 = vrot.slane %v339, 3
        %v351 = vmax.f32 %v348, %v349
        %v352 = vrot.slane %v339, 4
        %v354 = vmax.f32 %v351, %v352
        %v355 = vrot.slane %v339, 5
        %v357 = vmax.f32 %v354, %v355
        %v358 = vlaneseq
        %v359 = vshrl.u32 %v358, 7
        %v360 = vsub.s32 0, %v359
        %v361 = vrot.slane %v357, %v360
        %v362 = vsub.f32 %v339, %v361
        %v363 = vmul.f32 %v362, 1.442695
        %v364 = vpow.pop %v363
        %v366 = vrot.slane %v364, 1
        %v368 = vadd.f32 %v364, %v366
        %v369 = vrot.slane %v364, 2
        %v371 = vadd.f32 %v368, %v369
        %v372 = vrot.slane %v364, 3
        %v374 = vadd.f32 %v371, %v372
        %v375 = vrot.slane %v364, 4
        %v377 = vadd.f32 %v374, %v375
        %v378 = vrot.slane %v364, 5
        %v380 = vadd.f32 %v377, %v378
        %v381 = vlaneseq
        %v382 = vshrl.u32 %v381, 7
        %v383 = vsub.s32 0, %v382
        %v384 = vrot.slane %v380, %v383
        %v385 = vrcp.pop %v384
        %v386 = vmul.f32 %v364, %v385
        %vm387 = vcmask 523264
        %v389 = vsel %vm387, %v386, 0
        %v392 = vsel %vm387, %v329, 0
        %v395 = vsel %vm387, %v334, 0
        %397 = vmatprep.subr.mxu0 0.0
        %398 = vmatpush1.xpose.msra.mxu0 %v392
        %399 = vmatprep.subr.mxu0 0.0
        %400 = vmatpush1.xpose.msra.mxu0 %v395
        %401 = vmatprep.subr.mxu0 0.0
        %402 = vmatpush1.xpose.msra.mxu0 0.0
        %403 = vmatprep.subr.mxu0 0.0
        %404 = vmatpush1.xpose.msra.mxu0 0.0
        %405 = vmatprep.subr.mxu0 0.0
        %406 = vmatpush1.xpose.msra.mxu0 0.0
        %407 = vmatprep.subr.mxu0 0.0
        %408 = vmatpush1.xpose.msra.mxu0 0.0
        %409 = vmatprep.subr.mxu0 0.0
        %410 = vmatpush1.xpose.msra.mxu0 0.0
        %411 = vmatprep.subr.mxu0 0.0
        %412 = vmatpush1.xpose.msra.mxu0 0.0
        %413 = vmatprep.subr.mxu0 0.0
        %414 = vmatpush1.xpose.msra.mxu0 0.0
        %415 = vmatprep.subr.mxu0 0.0
        %416 = vmatpush1.xpose.msra.mxu0 0.0
        %417 = vmatprep.subr.mxu0 0.0
        %418 = vmatpush1.xpose.msra.mxu0 0.0
        %419 = vmatprep.subr.mxu0 0.0
        %420 = vmatpush1.xpose.msra.mxu0 0.0
        %421 = vmatprep.subr.mxu0 0.0
        %422 = vmatpush1.xpose.msra.mxu0 0.0
        %423 = vmatprep.subr.mxu0 0.0
        %424 = vmatpush1.xpose.msra.mxu0 0.0
        %425 = vmatprep.subr.mxu0 0.0
        %426 = vmatpush1.xpose.msra.mxu0 0.0
        %427 = vmatprep.subr.mxu0 0.0
        %428 = vmatpush1.xpose.msra.mxu0 0.0
        %429 = vmatprep.subr.mxu0 0.0
        %430 = vmatpush1.xpose.msra.mxu0 0.0
        %431 = vmatprep.subr.mxu0 0.0
        %432 = vmatpush1.xpose.msra.mxu0 0.0
        %433 = vmatprep.subr.mxu0 0.0
        %434 = vmatpush1.xpose.msra.mxu0 0.0
        %435 = vmatprep.subr.mxu0 0.0
        %436 = vmatpush1.xpose.msra.mxu0 0.0
        %437 = vmatprep.subr.mxu0 0.0
        %438 = vmatpush1.xpose.msra.mxu0 0.0
        %439 = vmatprep.subr.mxu0 0.0
        %440 = vmatpush1.xpose.msra.mxu0 0.0
        %441 = vmatprep.subr.mxu0 0.0
        %442 = vmatpush1.xpose.msra.mxu0 0.0
        %443 = vmatprep.subr.mxu0 0.0
        %444 = vmatpush1.xpose.msra.mxu0 0.0
        %445 = vmatprep.subr.mxu0 0.0
        %446 = vmatpush1.xpose.msra.mxu0 0.0
        %447 = vmatprep.subr.mxu0 0.0
        %448 = vmatpush1.xpose.msra.mxu0 0.0
        %449 = vmatprep.subr.mxu0 0.0
        %450 = vmatpush1.xpose.msra.mxu0 0.0
        %451 = vmatprep.subr.mxu0 0.0
        %452 = vmatpush1.xpose.msra.mxu0 0.0
        %453 = vmatprep.subr.mxu0 0.0
        %454 = vmatpush1.xpose.msra.mxu0 0.0
        %455 = vmatprep.subr.mxu0 0.0
        %456 = vmatpush1.xpose.msra.mxu0 0.0
        %457 = vmatprep.subr.mxu0 0.0
        %458 = vmatpush1.xpose.msra.mxu0 0.0
        %459 = vmatprep.subr.mxu0 0.0
        %460 = vmatpush1.xpose.msra.mxu0 0.0
        %461 = vmatprep.mubr.f32.mxu0 0.0
        %462 = vmatmul.mubr.f32.gmra.mrb[0].mxu0 %v389
        %v463 = vpop.f32.mrb[0].mxu0
        %v464 = vadd.f32 0.0, %v463
        %v465 = vpop.f32.mrb[0].mxu0
        %466 = vdwg.mxu0
        %vm467 = vcmask 521216
        %468 = vst.msk [vmem:[%s222] sm:$0x3f] %vm467, %v386
        %vm469 = vcmask 128000
        %470 = vst.msk [vmem:[%s226] sm:$0x3f] %vm469, %v464
        %p471 = scmp.lt.s32.totalorder %s19, 1
        %s472 = scalar_select %p471, %s19, 1
        %s473 = smul.addr %s472, 8
        %s474 = scalar_lea.vmem %s3, %s473
        %p475 = scmp.lt.s32.totalorder %s19, 1
        %s476 = scalar_select %p475, %s19, 1
        %s477 = smul.addr %s476, 8
        %s478 = scalar_lea.vmem %s4, %s477
        // Predicated region
        $region37: #{tpu_custom_call.1} parent=31 // pred_check
          %p479 = pneg %p105
        $region38: #{tpu_custom_call.1} parent=31 // pred_check_branch
          %481 = sbr.rel (%p479) target = $region40
        $region39: #{tpu_custom_call.1} parent=31 // pred_region
          _
        $region40: #{tpu_custom_call.1} parent=31 // pred_fallthru
          _
        // Predicated region
        $region41: #{tpu_custom_call.1} parent=31 // pred_check
          %p482 = pneg %p131
        $region42: #{tpu_custom_call.1} parent=31 // pred_check_branch
          %484 = sbr.rel (%p482) target = $region44
        $region43: #{tpu_custom_call.1} parent=31 // pred_region
          _
        $region44: #{tpu_custom_call.1} parent=31 // pred_fallthru
          _
      $region32: #{tpu_custom_call.1} parent=5 // pred_fallthru
        _
      %p485 = scmp.le.s32.totalorder 2, %s14
      // Predicated region
      $region45: #{tpu_custom_call.1} parent=5 // pred_check
        %p486 = pneg %p485
      $region46: #{tpu_custom_call.1} parent=5 // pred_check_branch
        %488 = sbr.rel (%p486) target = $region48
      $region47: #{tpu_custom_call.1} parent=5 // pred_region
        %s489 = ssub.s32 %s14, 2
        // Predicated region
        $region49: #{tpu_custom_call.1} parent=47 // pred_check
          %p490 = pneg %p111
        $region50: #{tpu_custom_call.1} parent=47 // pred_check_branch
          %492 = sbr.rel (%p490) target = $region52
        $region51: #{tpu_custom_call.1} parent=47 // pred_region
          %p493 = scmp.lt.s32.totalorder %s20, 1
          %s494 = scalar_select %p493, %s20, 1
          %s495 = smul.addr %s494, 8
          %s496 = scalar_lea.vmem %s3, %s495
        $region52: #{tpu_custom_call.1} parent=47 // pred_fallthru
          _
        // Predicated region
        $region53: #{tpu_custom_call.1} parent=47 // pred_check
          %p497 = pneg %p137
        $region54: #{tpu_custom_call.1} parent=47 // pred_check_branch
          %499 = sbr.rel (%p497) target = $region56
        $region55: #{tpu_custom_call.1} parent=47 // pred_region
          %p500 = scmp.lt.s32.totalorder %s20, 1
          %s501 = scalar_select %p500, %s20, 1
          %s502 = smul.addr %s501, 8
          %s503 = scalar_lea.vmem %s4, %s502
        $region56: #{tpu_custom_call.1} parent=47 // pred_fallthru
          _
      $region48: #{tpu_custom_call.1} parent=5 // pred_fallthru
        _
    $region6: #{tpu_custom_call.1} parent=1 // loop_footer
      %s18 = sadd.s32 1, %s14
    $region7: #{tpu_custom_call.1} parent=1 // loop_footer_branch
      %13 = sbr.rel target = $region3
    $region8: #{tpu_custom_call.1} parent=1 // loop_exit
      _
    %504 = vsyncpa [#allocation3], 1
    %s505 = scalar_lea.sflag [#allocation3], 1
    %506 = vsyncpa %s505, 1

</llo_original>
